<compile_context>
chip_gen: v5e
topology: v5e:2x2
jax: 0.10.0
libtpu: 0.0.40
codegen_flags: <defaults>
</compile_context>

<pallas_src>
import jax
import jax.numpy as jnp
from jax.experimental import pallas as pl
from jax.experimental.pallas import tpu as pltpu


def lstm_kernel(toks_ref,                       # VMEM (S*B_pad, 1) int32, time-major
                wih_ref,                        # VMEM (C_pad, 4H)  W_ih + bias, g-cols x2
                whh_ref,                        # VMEM (H, 4H)      W_hh,        g-cols x2
                wout_ref, bout_ref,             # VMEM (H, 128), (1, 128) padded projection
                out_ref,                        # VMEM (B_pad, 128) lane-dense output
                xw_sc):                         # VMEM scratch (S*B_pad, 4H)
    B = out_ref.shape[0]
    H = whh_ref.shape[0]
    fourH = whh_ref.shape[1]
    SB, Cp = xw_sc.shape[0], wih_ref.shape[0]
    S = SB // B

    # ---- Input projection for the whole sequence: one one-hot MXU matmul. ---
    # Bias is already folded into wih_ref, g-gate columns pre-scaled by 2.
    toks = toks_ref[...]                                            # (SB, 1) int32
    cls = jax.lax.broadcasted_iota(jnp.int32, (SB, Cp), 1)
    one_hot = (cls == toks).astype(jnp.float32)                     # (SB, Cp)
    xw_sc[...] = jnp.dot(one_hot, wih_ref[...],
                         preferred_element_type=jnp.float32)        # (SB, 4H)

    # ---- Hoist loop-invariant loads / constant vregs. -----------------------
    whh = whh_ref[...]                                              # (H, 4H)
    col = jax.lax.broadcasted_iota(jnp.int32, (B, fourH), 1)
    g_mask = jnp.logical_and(col >= 2 * H, col < 3 * H)             # g-gate lanes
    g_scale = jnp.where(g_mask, 2.0, 1.0).astype(jnp.float32)
    g_shift = jnp.where(g_mask, -1.0, 0.0).astype(jnp.float32)

    def step(t, carry):
        h, c = carry
        xw = xw_sc[pl.ds(pl.multiple_of(t * B, 8), B), :]           # (B, 4H) aligned
        gates = xw + jnp.dot(h, whh, preferred_element_type=jnp.float32)
        # One EUP pass over the full 128-lane vreg; g lanes were pre-scaled by 2
        # so tanh(z) = 2*sigmoid(2z) - 1 is recovered with a hoisted affine.
        act = jax.nn.sigmoid(gates) * g_scale + g_shift
        i_g = act[:, 0:H]
        f_g = act[:, H:2 * H]
        g_g = act[:, 2 * H:3 * H]
        o_g = act[:, 3 * H:4 * H]
        c_new = f_g * c + i_g * g_g
        h_new = o_g * jnp.tanh(c_new)
        return (h_new, c_new)

    h0 = jnp.zeros((B, H), jnp.float32)
    c0 = jnp.zeros((B, H), jnp.float32)
    h_fin, _ = jax.lax.fori_loop(0, S, step, (h0, c0), unroll=True)

    # Lane-dense (B_pad, 128) store; padded lanes are zero by construction.
    out_ref[...] = (jnp.dot(h_fin, wout_ref[...], preferred_element_type=jnp.float32)
                    + bout_ref[...])


def text_lstm_forward(tokens, w_ih, w_hh, bias, w_out, b_out):
    """tokens: [batch, seq_len] int32 token ids (argmax of the one-hot x)."""
    B, S = tokens.shape
    C, fourH = w_ih.shape
    H = w_hh.shape[0]
    assert fourH == 4 * H

    LANES = 128
    B_pad = ((B + 7) // 8) * 8                      # f32 sublane multiple
    C_pad = ((C + 7) // 8) * 8                      # contraction rows of W_ih
    OUT_PAD = ((C + LANES - 1) // LANES) * LANES    # lane-dense output width

    # Fold the tanh(z) = 2*sigmoid(2z) - 1 rewrite into the g-gate columns.
    gsl = slice(2 * H, 3 * H)
    w_ih_s = w_ih.at[:, gsl].multiply(2.0)
    w_hh_s = w_hh.at[:, gsl].multiply(2.0)
    bias_s = bias.at[:, gsl].multiply(2.0)

    # Input is one-hot => fold bias into W_ih rows, then pad rows to C_pad
    # (padded rows are never selected: token ids < C).
    w_ih_fold = w_ih_s + bias_s                                       # (C, 4H)
    w_ih_p = jnp.zeros((C_pad, fourH), jnp.float32).at[:C, :].set(w_ih_fold)

    # Lane-dense padded output projection.
    w_out_p = jnp.zeros((H, OUT_PAD), jnp.float32).at[:, :C].set(w_out)
    b_out_p = jnp.zeros((1, OUT_PAD), jnp.float32).at[:, :C].set(b_out)

    # Pad batch (extra rows use token 0; their output rows are sliced off)
    # and flatten time-major for the in-kernel one-hot build.
    toks_p = jnp.zeros((B_pad, S), jnp.int32).at[:B, :].set(tokens.astype(jnp.int32))
    toks_tm = jnp.transpose(toks_p, (1, 0)).reshape(S * B_pad, 1)     # (S*B_pad, 1)

    out = pl.pallas_call(
        lstm_kernel,
        out_shape=jax.ShapeDtypeStruct((B_pad, OUT_PAD), jnp.float32),
        grid_spec=pltpu.PrefetchScalarGridSpec(
            num_scalar_prefetch=0,
            grid=(1,),                          # whole recurrence in one step
            in_specs=[
                pl.BlockSpec((S * B_pad, 1), lambda i: (0, 0)),       # token ids
                pl.BlockSpec((C_pad, fourH), lambda i: (0, 0)),       # W_ih (+bias)
                pl.BlockSpec((H, fourH), lambda i: (0, 0)),           # W_hh
                pl.BlockSpec((H, OUT_PAD), lambda i: (0, 0)),         # W_out
                pl.BlockSpec((1, OUT_PAD), lambda i: (0, 0)),         # b_out
            ],
            out_specs=pl.BlockSpec((B_pad, OUT_PAD), lambda i: (0, 0)),
            scratch_shapes=[
                pltpu.VMEM((S * B_pad, fourH), jnp.float32),          # x@W_ih + b
            ],
        ),
        compiler_params=pltpu.CompilerParams(
            dimension_semantics=("arbitrary",)),
    )(toks_tm, w_ih_p, w_hh_s, w_out_p, b_out_p)

    return out[:B, :C]


def reference_forward(tokens, w_ih, w_hh, bias, w_out, b_out):
    """Pure-JAX reference mirroring the PyTorch module (one-hot LSTM)."""
    B, S = tokens.shape
    C = w_ih.shape[0]
    H = w_hh.shape[0]
    x = jax.nn.one_hot(tokens, C, dtype=jnp.float32)     # (B, S, C)
    x_tm = jnp.transpose(x, (1, 0, 2))                   # x.transpose(0, 1)
    h = jnp.zeros((B, H), jnp.float32)
    c = jnp.zeros((B, H), jnp.float32)
    for t in range(S):
        gates = x_tm[t] @ w_ih + h @ w_hh + bias
        i = jax.nn.sigmoid(gates[:, 0:H])
        f = jax.nn.sigmoid(gates[:, H:2 * H])
        g = jnp.tanh(gates[:, 2 * H:3 * H])
        o = jax.nn.sigmoid(gates[:, 3 * H:4 * H])
        c = f * c + i * g
        h = o * jnp.tanh(c)
    return h @ w_out + b_out


if __name__ == "__main__":
    n_class, n_hidden = 26, 32
    batch, seq_len = 2, 8

    key = jax.random.PRNGKey(0)
    k_tok, k_ih, k_hh, k_bih, k_bhh, k_w = jax.random.split(key, 6)

    # Token ids (the PyTorch module feeds their one-hot encoding).
    tokens = jax.random.randint(k_tok, (batch, seq_len), 0, n_class, dtype=jnp.int32)

    # Deterministic parameter init (PyTorch LSTM gate order i, f, g, o).
    scale = 0.1
    w_ih = scale * jax.random.normal(k_ih, (n_class, 4 * n_hidden), jnp.float32)
    w_hh = scale * jax.random.normal(k_hh, (n_hidden, 4 * n_hidden), jnp.float32)
    bias = (scale * jax.random.normal(k_bih, (1, 4 * n_hidden), jnp.float32)
            + scale * jax.random.normal(k_bhh, (1, 4 * n_hidden), jnp.float32))
    w_out = scale * jax.random.normal(k_w, (n_hidden, n_class), jnp.float32)
    b_out = jnp.ones((1, n_class), jnp.float32)           # nn.Parameter(torch.ones(n_class))

    out = text_lstm_forward(tokens, w_ih, w_hh, bias, w_out, b_out)
    out = jax.block_until_ready(out)

    ref = reference_forward(tokens, w_ih, w_hh, bias, w_out, b_out)
    assert out.shape == (batch, n_class)
    assert jnp.allclose(out, ref, rtol=1e-4, atol=1e-4), float(jnp.max(jnp.abs(out - ref)))

    print("KERNEL_OK")
</pallas_src>

<mosaic_0001>
module attributes {stable_mosaic.version = 11 : i64} {
  func.func @lstm_kernel(%arg0: i32, %arg1: memref<64x1xi32, #tpu.memory_space<vmem>>, %arg2: memref<32x128xf32, #tpu.memory_space<vmem>>, %arg3: memref<32x128xf32, #tpu.memory_space<vmem>>, %arg4: memref<32x128xf32, #tpu.memory_space<vmem>>, %arg5: memref<1x128xf32, #tpu.memory_space<vmem>>, %arg6: memref<8x128xf32, #tpu.memory_space<vmem>>, %arg7: memref<64x128xf32, #tpu.memory_space<vmem>>) attributes {dimension_semantics = [#tpu.dimension_semantics<arbitrary>], iteration_bounds = array<i64: 1>, scalar_prefetch = 0 : i64, scratch_operands = 1 : i64, tpu.core_type = #tpu.core_type<tc>, window_params = [{pipeline_mode = #tpu.pipeline_mode<synchronous>, transform_indices = @transform_0, window_bounds = array<i64: 64, 1>}, {pipeline_mode = #tpu.pipeline_mode<synchronous>, transform_indices = @transform_1, window_bounds = array<i64: 32, 128>}, {pipeline_mode = #tpu.pipeline_mode<synchronous>, transform_indices = @transform_2, window_bounds = array<i64: 32, 128>}, {pipeline_mode = #tpu.pipeline_mode<synchronous>, transform_indices = @transform_3, window_bounds = array<i64: 32, 128>}, {pipeline_mode = #tpu.pipeline_mode<synchronous>, transform_indices = @transform_4, window_bounds = array<i64: 1, 128>}, {pipeline_mode = #tpu.pipeline_mode<synchronous>, transform_indices = @transform_5, window_bounds = array<i64: 8, 128>}]} {
    %c0 = arith.constant 0 : index
    %c0_0 = arith.constant 0 : index
    %0 = vector.load %arg1[%c0, %c0_0] : memref<64x1xi32, #tpu.memory_space<vmem>>, vector<64x1xi32>
    %1 = tpu.iota {dimensions = array<i32: 1>} : vector<64x32xi32>
    %2 = vector.broadcast %0 : vector<64x1xi32> to vector<64x32xi32>
    %3 = arith.cmpi eq, %1, %2 : vector<64x32xi32>
    %4 = arith.extui %3 : vector<64x32xi1> to vector<64x32xi32>
    %5 = arith.sitofp %4 : vector<64x32xi32> to vector<64x32xf32>
    %c0_1 = arith.constant 0 : index
    %c0_2 = arith.constant 0 : index
    %6 = vector.load %arg2[%c0_1, %c0_2] : memref<32x128xf32, #tpu.memory_space<vmem>>, vector<32x128xf32>
    %cst = arith.constant dense<0.000000e+00> : vector<64x128xf32>
    %7 = tpu.matmul %5, %6, %cst {dimension_numbers = #tpu.dot_dimension_numbers<[1], [0], [0], [1], [0, 0, 1, 1], [], []>} : vector<64x32xf32>, vector<32x128xf32>, vector<64x128xf32> -> vector<64x128xf32>
    %c0_3 = arith.constant 0 : index
    %c0_4 = arith.constant 0 : index
    %8 = vector.load %arg7[%c0_3, %c0_4] : memref<64x128xf32, #tpu.memory_space<vmem>>, vector<64x128xf32>
    tpu.vector_store %arg7[%c0_3, %c0_4], %7 {strides = array<i32>} : memref<64x128xf32, #tpu.memory_space<vmem>>, vector<64x128xf32>,
    %c0_5 = arith.constant 0 : index
    %c0_6 = arith.constant 0 : index
    %9 = vector.load %arg3[%c0_5, %c0_6] : memref<32x128xf32, #tpu.memory_space<vmem>>, vector<32x128xf32>
    %10 = tpu.iota {dimensions = array<i32: 1>} : vector<8x128xi32>
    %c64_i32 = arith.constant 64 : i32
    %11 = vector.broadcast %c64_i32 : i32 to vector<8x128xi32>
    %12 = arith.cmpi sge, %10, %11 : vector<8x128xi32>
    %c96_i32 = arith.constant 96 : i32
    %13 = vector.broadcast %c96_i32 : i32 to vector<8x128xi32>
    %14 = arith.cmpi slt, %10, %13 : vector<8x128xi32>
    %15 = arith.andi %12, %14 : vector<8x128xi1>
    %cst_7 = arith.constant 2.000000e+00 : f32
    %cst_8 = arith.constant 1.000000e+00 : f32
    %16 = vector.broadcast %cst_7 : f32 to vector<8x128xf32>
    %17 = vector.broadcast %cst_8 : f32 to vector<8x128xf32>
    %18 = arith.select %15, %16, %17 : vector<8x128xi1>, vector<8x128xf32>
    %cst_9 = arith.constant -1.000000e+00 : f32
    %cst_10 = arith.constant 0.000000e+00 : f32
    %19 = vector.broadcast %cst_9 : f32 to vector<8x128xf32>
    %20 = vector.broadcast %cst_10 : f32 to vector<8x128xf32>
    %21 = arith.select %15, %19, %20 : vector<8x128xi1>, vector<8x128xf32>
    %cst_11 = arith.constant 0.000000e+00 : f32
    %22 = vector.broadcast %cst_11 : f32 to vector<8x32xf32>
    %cst_12 = arith.constant 0.000000e+00 : f32
    %23 = vector.broadcast %cst_12 : f32 to vector<8x32xf32>
    %c0_i32 = arith.constant 0 : i32
    %c8_i32 = arith.constant 8 : i32
    %24 = arith.muli %c0_i32, %c8_i32 : i32
    %25 = tpu.assume_multiple %24, 8 : i32
    %26 = arith.index_cast %25 : i32 to index
    %c0_13 = arith.constant 0 : index
    %27 = vector.load %arg7[%26, %c0_13] : memref<64x128xf32, #tpu.memory_space<vmem>>, vector<8x128xf32>
    %cst_14 = arith.constant dense<0.000000e+00> : vector<8x128xf32>
    %28 = tpu.matmul %22, %9, %cst_14 {dimension_numbers = #tpu.dot_dimension_numbers<[1], [0], [0], [1], [0, 0, 1, 1], [], []>} : vector<8x32xf32>, vector<32x128xf32>, vector<8x128xf32> -> vector<8x128xf32>
    %29 = arith.addf %27, %28 : vector<8x128xf32>
    %30 = arith.negf %29 : vector<8x128xf32>
    %31 = math.exp %30 : vector<8x128xf32>
    %cst_15 = arith.constant 1.000000e+00 : f32
    %32 = vector.broadcast %cst_15 : f32 to vector<8x128xf32>
    %33 = arith.addf %32, %31 : vector<8x128xf32>
    %34 = arith.divf %32, %33 : vector<8x128xf32>
    %35 = arith.mulf %34, %18 : vector<8x128xf32>
    %36 = arith.addf %35, %21 : vector<8x128xf32>
    %37 = vector.extract_strided_slice %36 {offsets = [0, 0], sizes = [8, 32], strides = [1, 1]} : vector<8x128xf32> to vector<8x32xf32>
    %38 = vector.extract_strided_slice %36 {offsets = [0, 32], sizes = [8, 32], strides = [1, 1]} : vector<8x128xf32> to vector<8x32xf32>
    %39 = vector.extract_strided_slice %36 {offsets = [0, 64], sizes = [8, 32], strides = [1, 1]} : vector<8x128xf32> to vector<8x32xf32>
    %40 = vector.extract_strided_slice %36 {offsets = [0, 96], sizes = [8, 32], strides = [1, 1]} : vector<8x128xf32> to vector<8x32xf32>
    %41 = arith.mulf %38, %23 : vector<8x32xf32>
    %42 = arith.mulf %37, %39 : vector<8x32xf32>
    %43 = arith.addf %41, %42 : vector<8x32xf32>
    %44 = math.tanh %43 : vector<8x32xf32>
    %45 = arith.mulf %40, %44 : vector<8x32xf32>
    %c1_i32 = arith.constant 1 : i32
    %c8_i32_16 = arith.constant 8 : i32
    %46 = arith.muli %c1_i32, %c8_i32_16 : i32
    %47 = tpu.assume_multiple %46, 8 : i32
    %48 = arith.index_cast %47 : i32 to index
    %c0_17 = arith.constant 0 : index
    %49 = vector.load %arg7[%48, %c0_17] : memref<64x128xf32, #tpu.memory_space<vmem>>, vector<8x128xf32>
    %cst_18 = arith.constant dense<0.000000e+00> : vector<8x128xf32>
    %50 = tpu.matmul %45, %9, %cst_18 {dimension_numbers = #tpu.dot_dimension_numbers<[1], [0], [0], [1], [0, 0, 1, 1], [], []>} : vector<8x32xf32>, vector<32x128xf32>, vector<8x128xf32> -> vector<8x128xf32>
    %51 = arith.addf %49, %50 : vector<8x128xf32>
    %52 = arith.negf %51 : vector<8x128xf32>
    %53 = math.exp %52 : vector<8x128xf32>
    %cst_19 = arith.constant 1.000000e+00 : f32
    %54 = vector.broadcast %cst_19 : f32 to vector<8x128xf32>
    %55 = arith.addf %54, %53 : vector<8x128xf32>
    %56 = arith.divf %54, %55 : vector<8x128xf32>
    %57 = arith.mulf %56, %18 : vector<8x128xf32>
    %58 = arith.addf %57, %21 : vector<8x128xf32>
    %59 = vector.extract_strided_slice %58 {offsets = [0, 0], sizes = [8, 32], strides = [1, 1]} : vector<8x128xf32> to vector<8x32xf32>
    %60 = vector.extract_strided_slice %58 {offsets = [0, 32], sizes = [8, 32], strides = [1, 1]} : vector<8x128xf32> to vector<8x32xf32>
    %61 = vector.extract_strided_slice %58 {offsets = [0, 64], sizes = [8, 32], strides = [1, 1]} : vector<8x128xf32> to vector<8x32xf32>
    %62 = vector.extract_strided_slice %58 {offsets = [0, 96], sizes = [8, 32], strides = [1, 1]} : vector<8x128xf32> to vector<8x32xf32>
    %63 = arith.mulf %60, %43 : vector<8x32xf32>
    %64 = arith.mulf %59, %61 : vector<8x32xf32>
    %65 = arith.addf %63, %64 : vector<8x32xf32>
    %66 = math.tanh %65 : vector<8x32xf32>
    %67 = arith.mulf %62, %66 : vector<8x32xf32>
    %c2_i32 = arith.constant 2 : i32
    %c8_i32_20 = arith.constant 8 : i32
    %68 = arith.muli %c2_i32, %c8_i32_20 : i32
    %69 = tpu.assume_multiple %68, 8 : i32
    %70 = arith.index_cast %69 : i32 to index
    %c0_21 = arith.constant 0 : index
    %71 = vector.load %arg7[%70, %c0_21] : memref<64x128xf32, #tpu.memory_space<vmem>>, vector<8x128xf32>
    %cst_22 = arith.constant dense<0.000000e+00> : vector<8x128xf32>
    %72 = tpu.matmul %67, %9, %cst_22 {dimension_numbers = #tpu.dot_dimension_numbers<[1], [0], [0], [1], [0, 0, 1, 1], [], []>} : vector<8x32xf32>, vector<32x128xf32>, vector<8x128xf32> -> vector<8x128xf32>
    %73 = arith.addf %71, %72 : vector<8x128xf32>
    %74 = arith.negf %73 : vector<8x128xf32>
    %75 = math.exp %74 : vector<8x128xf32>
    %cst_23 = arith.constant 1.000000e+00 : f32
    %76 = vector.broadcast %cst_23 : f32 to vector<8x128xf32>
    %77 = arith.addf %76, %75 : vector<8x128xf32>
    %78 = arith.divf %76, %77 : vector<8x128xf32>
    %79 = arith.mulf %78, %18 : vector<8x128xf32>
    %80 = arith.addf %79, %21 : vector<8x128xf32>
    %81 = vector.extract_strided_slice %80 {offsets = [0, 0], sizes = [8, 32], strides = [1, 1]} : vector<8x128xf32> to vector<8x32xf32>
    %82 = vector.extract_strided_slice %80 {offsets = [0, 32], sizes = [8, 32], strides = [1, 1]} : vector<8x128xf32> to vector<8x32xf32>
    %83 = vector.extract_strided_slice %80 {offsets = [0, 64], sizes = [8, 32], strides = [1, 1]} : vector<8x128xf32> to vector<8x32xf32>
    %84 = vector.extract_strided_slice %80 {offsets = [0, 96], sizes = [8, 32], strides = [1, 1]} : vector<8x128xf32> to vector<8x32xf32>
    %85 = arith.mulf %82, %65 : vector<8x32xf32>
    %86 = arith.mulf %81, %83 : vector<8x32xf32>
    %87 = arith.addf %85, %86 : vector<8x32xf32>
    %88 = math.tanh %87 : vector<8x32xf32>
    %89 = arith.mulf %84, %88 : vector<8x32xf32>
    %c3_i32 = arith.constant 3 : i32
    %c8_i32_24 = arith.constant 8 : i32
    %90 = arith.muli %c3_i32, %c8_i32_24 : i32
    %91 = tpu.assume_multiple %90, 8 : i32
    %92 = arith.index_cast %91 : i32 to index
    %c0_25 = arith.constant 0 : index
    %93 = vector.load %arg7[%92, %c0_25] : memref<64x128xf32, #tpu.memory_space<vmem>>, vector<8x128xf32>
    %cst_26 = arith.constant dense<0.000000e+00> : vector<8x128xf32>
    %94 = tpu.matmul %89, %9, %cst_26 {dimension_numbers = #tpu.dot_dimension_numbers<[1], [0], [0], [1], [0, 0, 1, 1], [], []>} : vector<8x32xf32>, vector<32x128xf32>, vector<8x128xf32> -> vector<8x128xf32>
    %95 = arith.addf %93, %94 : vector<8x128xf32>
    %96 = arith.negf %95 : vector<8x128xf32>
    %97 = math.exp %96 : vector<8x128xf32>
    %cst_27 = arith.constant 1.000000e+00 : f32
    %98 = vector.broadcast %cst_27 : f32 to vector<8x128xf32>
    %99 = arith.addf %98, %97 : vector<8x128xf32>
    %100 = arith.divf %98, %99 : vector<8x128xf32>
    %101 = arith.mulf %100, %18 : vector<8x128xf32>
    %102 = arith.addf %101, %21 : vector<8x128xf32>
    %103 = vector.extract_strided_slice %102 {offsets = [0, 0], sizes = [8, 32], strides = [1, 1]} : vector<8x128xf32> to vector<8x32xf32>
    %104 = vector.extract_strided_slice %102 {offsets = [0, 32], sizes = [8, 32], strides = [1, 1]} : vector<8x128xf32> to vector<8x32xf32>
    %105 = vector.extract_strided_slice %102 {offsets = [0, 64], sizes = [8, 32], strides = [1, 1]} : vector<8x128xf32> to vector<8x32xf32>
    %106 = vector.extract_strided_slice %102 {offsets = [0, 96], sizes = [8, 32], strides = [1, 1]} : vector<8x128xf32> to vector<8x32xf32>
    %107 = arith.mulf %104, %87 : vector<8x32xf32>
    %108 = arith.mulf %103, %105 : vector<8x32xf32>
    %109 = arith.addf %107, %108 : vector<8x32xf32>
    %110 = math.tanh %109 : vector<8x32xf32>
    %111 = arith.mulf %106, %110 : vector<8x32xf32>
    %c4_i32 = arith.constant 4 : i32
    %c8_i32_28 = arith.constant 8 : i32
    %112 = arith.muli %c4_i32, %c8_i32_28 : i32
    %113 = tpu.assume_multiple %112, 8 : i32
    %114 = arith.index_cast %113 : i32 to index
    %c0_29 = arith.constant 0 : index
    %115 = vector.load %arg7[%114, %c0_29] : memref<64x128xf32, #tpu.memory_space<vmem>>, vector<8x128xf32>
    %cst_30 = arith.constant dense<0.000000e+00> : vector<8x128xf32>
    %116 = tpu.matmul %111, %9, %cst_30 {dimension_numbers = #tpu.dot_dimension_numbers<[1], [0], [0], [1], [0, 0, 1, 1], [], []>} : vector<8x32xf32>, vector<32x128xf32>, vector<8x128xf32> -> vector<8x128xf32>
    %117 = arith.addf %115, %116 : vector<8x128xf32>
    %118 = arith.negf %117 : vector<8x128xf32>
    %119 = math.exp %118 : vector<8x128xf32>
    %cst_31 = arith.constant 1.000000e+00 : f32
    %120 = vector.broadcast %cst_31 : f32 to vector<8x128xf32>
    %121 = arith.addf %120, %119 : vector<8x128xf32>
    %122 = arith.divf %120, %121 : vector<8x128xf32>
    %123 = arith.mulf %122, %18 : vector<8x128xf32>
    %124 = arith.addf %123, %21 : vector<8x128xf32>
    %125 = vector.extract_strided_slice %124 {offsets = [0, 0], sizes = [8, 32], strides = [1, 1]} : vector<8x128xf32> to vector<8x32xf32>
    %126 = vector.extract_strided_slice %124 {offsets = [0, 32], sizes = [8, 32], strides = [1, 1]} : vector<8x128xf32> to vector<8x32xf32>
    %127 = vector.extract_strided_slice %124 {offsets = [0, 64], sizes = [8, 32], strides = [1, 1]} : vector<8x128xf32> to vector<8x32xf32>
    %128 = vector.extract_strided_slice %124 {offsets = [0, 96], sizes = [8, 32], strides = [1, 1]} : vector<8x128xf32> to vector<8x32xf32>
    %129 = arith.mulf %126, %109 : vector<8x32xf32>
    %130 = arith.mulf %125, %127 : vector<8x32xf32>
    %131 = arith.addf %129, %130 : vector<8x32xf32>
    %132 = math.tanh %131 : vector<8x32xf32>
    %133 = arith.mulf %128, %132 : vector<8x32xf32>
    %c5_i32 = arith.constant 5 : i32
    %c8_i32_32 = arith.constant 8 : i32
    %134 = arith.muli %c5_i32, %c8_i32_32 : i32
    %135 = tpu.assume_multiple %134, 8 : i32
    %136 = arith.index_cast %135 : i32 to index
    %c0_33 = arith.constant 0 : index
    %137 = vector.load %arg7[%136, %c0_33] : memref<64x128xf32, #tpu.memory_space<vmem>>, vector<8x128xf32>
    %cst_34 = arith.constant dense<0.000000e+00> : vector<8x128xf32>
    %138 = tpu.matmul %133, %9, %cst_34 {dimension_numbers = #tpu.dot_dimension_numbers<[1], [0], [0], [1], [0, 0, 1, 1], [], []>} : vector<8x32xf32>, vector<32x128xf32>, vector<8x128xf32> -> vector<8x128xf32>
    %139 = arith.addf %137, %138 : vector<8x128xf32>
    %140 = arith.negf %139 : vector<8x128xf32>
    %141 = math.exp %140 : vector<8x128xf32>
    %cst_35 = arith.constant 1.000000e+00 : f32
    %142 = vector.broadcast %cst_35 : f32 to vector<8x128xf32>
    %143 = arith.addf %142, %141 : vector<8x128xf32>
    %144 = arith.divf %142, %143 : vector<8x128xf32>
    %145 = arith.mulf %144, %18 : vector<8x128xf32>
    %146 = arith.addf %145, %21 : vector<8x128xf32>
    %147 = vector.extract_strided_slice %146 {offsets = [0, 0], sizes = [8, 32], strides = [1, 1]} : vector<8x128xf32> to vector<8x32xf32>
    %148 = vector.extract_strided_slice %146 {offsets = [0, 32], sizes = [8, 32], strides = [1, 1]} : vector<8x128xf32> to vector<8x32xf32>
    %149 = vector.extract_strided_slice %146 {offsets = [0, 64], sizes = [8, 32], strides = [1, 1]} : vector<8x128xf32> to vector<8x32xf32>
    %150 = vector.extract_strided_slice %146 {offsets = [0, 96], sizes = [8, 32], strides = [1, 1]} : vector<8x128xf32> to vector<8x32xf32>
    %151 = arith.mulf %148, %131 : vector<8x32xf32>
    %152 = arith.mulf %147, %149 : vector<8x32xf32>
    %153 = arith.addf %151, %152 : vector<8x32xf32>
    %154 = math.tanh %153 : vector<8x32xf32>
    %155 = arith.mulf %150, %154 : vector<8x32xf32>
    %c6_i32 = arith.constant 6 : i32
    %c8_i32_36 = arith.constant 8 : i32
    %156 = arith.muli %c6_i32, %c8_i32_36 : i32
    %157 = tpu.assume_multiple %156, 8 : i32
    %158 = arith.index_cast %157 : i32 to index
    %c0_37 = arith.constant 0 : index
    %159 = vector.load %arg7[%158, %c0_37] : memref<64x128xf32, #tpu.memory_space<vmem>>, vector<8x128xf32>
    %cst_38 = arith.constant dense<0.000000e+00> : vector<8x128xf32>
    %160 = tpu.matmul %155, %9, %cst_38 {dimension_numbers = #tpu.dot_dimension_numbers<[1], [0], [0], [1], [0, 0, 1, 1], [], []>} : vector<8x32xf32>, vector<32x128xf32>, vector<8x128xf32> -> vector<8x128xf32>
    %161 = arith.addf %159, %160 : vector<8x128xf32>
    %162 = arith.negf %161 : vector<8x128xf32>
    %163 = math.exp %162 : vector<8x128xf32>
    %cst_39 = arith.constant 1.000000e+00 : f32
    %164 = vector.broadcast %cst_39 : f32 to vector<8x128xf32>
    %165 = arith.addf %164, %163 : vector<8x128xf32>
    %166 = arith.divf %164, %165 : vector<8x128xf32>
    %167 = arith.mulf %166, %18 : vector<8x128xf32>
    %168 = arith.addf %167, %21 : vector<8x128xf32>
    %169 = vector.extract_strided_slice %168 {offsets = [0, 0], sizes = [8, 32], strides = [1, 1]} : vector<8x128xf32> to vector<8x32xf32>
    %170 = vector.extract_strided_slice %168 {offsets = [0, 32], sizes = [8, 32], strides = [1, 1]} : vector<8x128xf32> to vector<8x32xf32>
    %171 = vector.extract_strided_slice %168 {offsets = [0, 64], sizes = [8, 32], strides = [1, 1]} : vector<8x128xf32> to vector<8x32xf32>
    %172 = vector.extract_strided_slice %168 {offsets = [0, 96], sizes = [8, 32], strides = [1, 1]} : vector<8x128xf32> to vector<8x32xf32>
    %173 = arith.mulf %170, %153 : vector<8x32xf32>
    %174 = arith.mulf %169, %171 : vector<8x32xf32>
    %175 = arith.addf %173, %174 : vector<8x32xf32>
    %176 = math.tanh %175 : vector<8x32xf32>
    %177 = arith.mulf %172, %176 : vector<8x32xf32>
    %c7_i32 = arith.constant 7 : i32
    %c8_i32_40 = arith.constant 8 : i32
    %178 = arith.muli %c7_i32, %c8_i32_40 : i32
    %179 = tpu.assume_multiple %178, 8 : i32
    %180 = arith.index_cast %179 : i32 to index
    %c0_41 = arith.constant 0 : index
    %181 = vector.load %arg7[%180, %c0_41] : memref<64x128xf32, #tpu.memory_space<vmem>>, vector<8x128xf32>
    %cst_42 = arith.constant dense<0.000000e+00> : vector<8x128xf32>
    %182 = tpu.matmul %177, %9, %cst_42 {dimension_numbers = #tpu.dot_dimension_numbers<[1], [0], [0], [1], [0, 0, 1, 1], [], []>} : vector<8x32xf32>, vector<32x128xf32>, vector<8x128xf32> -> vector<8x128xf32>
    %183 = arith.addf %181, %182 : vector<8x128xf32>
    %184 = arith.negf %183 : vector<8x128xf32>
    %185 = math.exp %184 : vector<8x128xf32>
    %cst_43 = arith.constant 1.000000e+00 : f32
    %186 = vector.broadcast %cst_43 : f32 to vector<8x128xf32>
    %187 = arith.addf %186, %185 : vector<8x128xf32>
    %188 = arith.divf %186, %187 : vector<8x128xf32>
    %189 = arith.mulf %188, %18 : vector<8x128xf32>
    %190 = arith.addf %189, %21 : vector<8x128xf32>
    %191 = vector.extract_strided_slice %190 {offsets = [0, 0], sizes = [8, 32], strides = [1, 1]} : vector<8x128xf32> to vector<8x32xf32>
    %192 = vector.extract_strided_slice %190 {offsets = [0, 32], sizes = [8, 32], strides = [1, 1]} : vector<8x128xf32> to vector<8x32xf32>
    %193 = vector.extract_strided_slice %190 {offsets = [0, 64], sizes = [8, 32], strides = [1, 1]} : vector<8x128xf32> to vector<8x32xf32>
    %194 = vector.extract_strided_slice %190 {offsets = [0, 96], sizes = [8, 32], strides = [1, 1]} : vector<8x128xf32> to vector<8x32xf32>
    %195 = arith.mulf %192, %175 : vector<8x32xf32>
    %196 = arith.mulf %191, %193 : vector<8x32xf32>
    %197 = arith.addf %195, %196 : vector<8x32xf32>
    %198 = math.tanh %197 : vector<8x32xf32>
    %199 = arith.mulf %194, %198 : vector<8x32xf32>
    %c8_i32_44 = arith.constant 8 : i32
    %c0_45 = arith.constant 0 : index
    %c0_46 = arith.constant 0 : index
    %200 = vector.load %arg4[%c0_45, %c0_46] : memref<32x128xf32, #tpu.memory_space<vmem>>, vector<32x128xf32>
    %cst_47 = arith.constant dense<0.000000e+00> : vector<8x128xf32>
    %201 = tpu.matmul %199, %200, %cst_47 {dimension_numbers = #tpu.dot_dimension_numbers<[1], [0], [0], [1], [0, 0, 1, 1], [], []>} : vector<8x32xf32>, vector<32x128xf32>, vector<8x128xf32> -> vector<8x128xf32>
    %c0_48 = arith.constant 0 : index
    %c0_49 = arith.constant 0 : index
    %202 = vector.load %arg5[%c0_48, %c0_49] : memref<1x128xf32, #tpu.memory_space<vmem>>, vector<1x128xf32>
    %203 = vector.broadcast %202 : vector<1x128xf32> to vector<8x128xf32>
    %204 = arith.addf %201, %203 : vector<8x128xf32>
    %c0_50 = arith.constant 0 : index
    %c0_51 = arith.constant 0 : index
    %205 = vector.load %arg6[%c0_50, %c0_51] : memref<8x128xf32, #tpu.memory_space<vmem>>, vector<8x128xf32>
    tpu.vector_store %arg6[%c0_50, %c0_51], %204 {strides = array<i32>} : memref<8x128xf32, #tpu.memory_space<vmem>>, vector<8x128xf32>,
    return
  }
  func.func @transform_0(%arg0: i32) -> (i32, i32) {
    %c0_i32 = arith.constant 0 : i32
    %c0_i32_0 = arith.constant 0 : i32
    %c0_i32_1 = arith.constant 0 : i32
    return %c0_i32, %c0_i32_0 : i32, i32
  }
  func.func @transform_1(%arg0: i32) -> (i32, i32) {
    %c0_i32 = arith.constant 0 : i32
    %c0_i32_0 = arith.constant 0 : i32
    %c0_i32_1 = arith.constant 0 : i32
    return %c0_i32, %c0_i32_0 : i32, i32
  }
  func.func @transform_2(%arg0: i32) -> (i32, i32) {
    %c0_i32 = arith.constant 0 : i32
    %c0_i32_0 = arith.constant 0 : i32
    %c0_i32_1 = arith.constant 0 : i32
    return %c0_i32, %c0_i32_0 : i32, i32
  }
  func.func @transform_3(%arg0: i32) -> (i32, i32) {
    %c0_i32 = arith.constant 0 : i32
    %c0_i32_0 = arith.constant 0 : i32
    %c0_i32_1 = arith.constant 0 : i32
    return %c0_i32, %c0_i32_0 : i32, i32
  }
  func.func @transform_4(%arg0: i32) -> (i32, i32) {
    %c0_i32 = arith.constant 0 : i32
    %c0_i32_0 = arith.constant 0 : i32
    %c0_i32_1 = arith.constant 0 : i32
    return %c0_i32, %c0_i32_0 : i32, i32
  }
  func.func @transform_5(%arg0: i32) -> (i32, i32) {
    %c0_i32 = arith.constant 0 : i32
    %c0_i32_0 = arith.constant 0 : i32
    %c0_i32_1 = arith.constant 0 : i32
    return %c0_i32, %c0_i32_0 : i32, i32
  }
}

</mosaic_0001>

<llo_original>
// kernel: tpu_custom_call.1
$region0: #{tpu_custom_call.1}
  #allocation0 [shape = 'u32[]', space=smem, size = 0x4, offset = 0x4, fixed_abs, tag = 'smem constant byte address 0x4 - core index']
  #allocation1 [shape = 'u32[72,128]{1,0:T(1,128)}', space=vmem, size = 0x9000, scoped, tag = 'internal scratch']
  #allocation2 [shape = 'f32[64,128]{1,0:T(8,128)}', space=vmem, size = 0x8000, scoped, tag = 'scratch operand']
  %s0 = inlined_call_operand.vmem [shape: s32[64,1], index: 0, kind: input, shape index: {}]
  %s1 = inlined_call_operand.vmem [shape: f32[32,128], index: 1, kind: input, shape index: {}]
  %s2 = inlined_call_operand.vmem [shape: f32[32,128], index: 2, kind: input, shape index: {}]
  %s3 = inlined_call_operand.hbm [shape: f32[32,128], index: 3, kind: input, shape index: {}]
  %s4 = inlined_call_operand.vmem [shape: f32[1,128], index: 4, kind: input, shape index: {}]
  %s5 = inlined_call_operand.hbm [shape: f32[8,128], index: 5, kind: output, shape index: {}]
  %s6 = sld [smem:[#allocation0]]
  $region34: #{tpu_custom_call.1} parent=0
    _
  %s8 = ssub.s32 1, %s6
  %s9 = scalar_select 0, %s8, %s6
  $region1: #{tpu_custom_call.1} parent=0
    #allocation3 [shape = 'u8[16384]{0}', space=vmem, size = 0x4000, scoped, tag = 'input window, operand 3, single buffered']
    #allocation4 [shape = 's32[1]{0}', space=sflag, size = 0x4, scoped, tag = 'scoped memory for tpu_custom_call.1']
    #allocation5 [shape = 's32[1]{0}', space=sflag, size = 0x4, scoped, tag = 'scoped memory for tpu_custom_call.1']
    #allocation6 [shape = 'u8[4096]{0}', space=vmem, size = 0x1000, scoped, tag = 'output window, operand 0, single buffered']
    %10 = vsyncpa [#allocation4], 0
    %11 = vsyncpa [#allocation5], 0
    // Predicated region
    $region2: #{tpu_custom_call.1} parent=1 // pred_check
      _
    $region3: #{tpu_custom_call.1} parent=1 // pred_check_branch
      %13 = sbr.rel (0) target = $region5
    $region4: #{tpu_custom_call.1} parent=1 // pred_region
      _
    $region5: #{tpu_custom_call.1} parent=1 // pred_fallthru
      _
    // Predicated region
    $region6: #{tpu_custom_call.1} parent=1 // pred_check
      _
    $region7: #{tpu_custom_call.1} parent=1 // pred_check_branch
      %15 = sbr.rel (0) target = $region9
    $region8: #{tpu_custom_call.1} parent=1 // pred_region
      _
    $region9: #{tpu_custom_call.1} parent=1 // pred_fallthru
      _
    // Predicated region
    $region10: #{tpu_custom_call.1} parent=1 // pred_check
      _
    $region11: #{tpu_custom_call.1} parent=1 // pred_check_branch
      %17 = sbr.rel (0) target = $region13
    $region12: #{tpu_custom_call.1} parent=1 // pred_region
      _
    $region13: #{tpu_custom_call.1} parent=1 // pred_fallthru
      _
    // Predicated region
    $region14: #{tpu_custom_call.1} parent=1 // pred_check
      _
    $region15: #{tpu_custom_call.1} parent=1 // pred_check_branch
      %19 = sbr.rel (0) target = $region17
    $region16: #{tpu_custom_call.1} parent=1 // pred_region
      %21 = vsyncadd [#allocation4], 0
      %s22 = sshll.u32 %s3, 4
      %s23 = int_to_ptr.hbm [resolvable:$true] %s22
      %s24 = sshll.u32 [#allocation3], 4
      %s25 = int_to_ptr.vmem [resolvable:$true] %s24
      %30 = dma.hbm_to_vmem [thread:$0]  %s23, 512, %s25, [#allocation4], 128, 128, 8
    $region17: #{tpu_custom_call.1} parent=1 // pred_fallthru
      _
    // Predicated region
    $region18: #{tpu_custom_call.1} parent=1 // pred_check
      _
    $region19: #{tpu_custom_call.1} parent=1 // pred_check_branch
      %32 = sbr.rel (0) target = $region21
    $region20: #{tpu_custom_call.1} parent=1 // pred_region
      _
    $region21: #{tpu_custom_call.1} parent=1 // pred_fallthru
      _
    // Predicated region
    $region22: #{tpu_custom_call.1} parent=1 // pred_check
      _
    $region23: #{tpu_custom_call.1} parent=1 // pred_check_branch
      %34 = sbr.rel (0) target = $region25
    $region24: #{tpu_custom_call.1} parent=1 // pred_region
      %36 = dma.done [#allocation4], 512
    $region25: #{tpu_custom_call.1} parent=1 // pred_fallthru
      _
    %v37 = vld [vmem:[%s0] sm:$0xff]
    %v38 = vld [vmem:[%s0 + $0x8] sm:$0xff]
    %v39 = vld [vmem:[%s0 + $0x10] sm:$0xff]
    %v40 = vld [vmem:[%s0 + $0x18] sm:$0xff]
    %v41 = vld [vmem:[%s0 + $0x20] sm:$0xff]
    %v42 = vld [vmem:[%s0 + $0x28] sm:$0xff]
    %v43 = vld [vmem:[%s0 + $0x30] sm:$0xff]
    %v44 = vld [vmem:[%s0 + $0x38] sm:$0xff]
    %v45 = vlaneseq
    %v46 = vand.u32 %v45, 127
    %47 = vset.pattern.permute.xlu0 0
    %48 = vperm.xlu0 %47, %v37
    %v49 = vpop.permute.xlu0 %48
    %50 = vset.pattern.permute.xlu0 0
    %51 = vperm.xlu0 %50, %v38
    %v52 = vpop.permute.xlu0 %51
    %53 = vset.pattern.permute.xlu0 0
    %54 = vperm.xlu0 %53, %v39
    %v55 = vpop.permute.xlu0 %54
    %56 = vset.pattern.permute.xlu0 0
    %57 = vperm.xlu0 %56, %v40
    %v58 = vpop.permute.xlu0 %57
    %59 = vset.pattern.permute.xlu0 0
    %60 = vperm.xlu0 %59, %v41
    %v61 = vpop.permute.xlu0 %60
    %62 = vset.pattern.permute.xlu0 0
    %63 = vperm.xlu0 %62, %v42
    %v64 = vpop.permute.xlu0 %63
    %65 = vset.pattern.permute.xlu0 0
    %66 = vperm.xlu0 %65, %v43
    %v67 = vpop.permute.xlu0 %66
    %68 = vset.pattern.permute.xlu0 0
    %69 = vperm.xlu0 %68, %v44
    %v70 = vpop.permute.xlu0 %69
    %vm71 = vcmp.eq.s32.totalorder %v46, %v49
    %vm72 = vcmp.eq.s32.totalorder %v46, %v52
    %vm73 = vcmp.eq.s32.totalorder %v46, %v55
    %vm74 = vcmp.eq.s32.totalorder %v46, %v58
    %vm75 = vcmp.eq.s32.totalorder %v46, %v61
    %vm76 = vcmp.eq.s32.totalorder %v46, %v64
    %vm77 = vcmp.eq.s32.totalorder %v46, %v67
    %vm78 = vcmp.eq.s32.totalorder %v46, %v70
    %v79 = vsel %vm71, 1, 0
    %v80 = vsel %vm72, 1, 0
    %v81 = vsel %vm73, 1, 0
    %v82 = vsel %vm74, 1, 0
    %v83 = vsel %vm75, 1, 0
    %v84 = vsel %vm76, 1, 0
    %v85 = vsel %vm77, 1, 0
    %v86 = vsel %vm78, 1, 0
    %v87 = vcvt.s32.f32 %v79
    %v88 = vcvt.s32.f32 %v80
    %v89 = vcvt.s32.f32 %v81
    %v90 = vcvt.s32.f32 %v82
    %v91 = vcvt.s32.f32 %v83
    %v92 = vcvt.s32.f32 %v84
    %v93 = vcvt.s32.f32 %v85
    %v94 = vcvt.s32.f32 %v86
    %v95 = vld [vmem:[%s1] sm:$0xff]
    %v96 = vld [vmem:[%s1 + $0x8] sm:$0xff]
    %v97 = vld [vmem:[%s1 + $0x10] sm:$0xff]
    %v98 = vld [vmem:[%s1 + $0x18] sm:$0xff]
    %vm99 = vcmask 261120
    %v101 = vsel %vm99, %v87, 0
    %v104 = vsel %vm99, %v88, 0
    %v107 = vsel %vm99, %v89, 0
    %v110 = vsel %vm99, %v90, 0
    %v113 = vsel %vm99, %v91, 0
    %v116 = vsel %vm99, %v92, 0
    %v119 = vsel %vm99, %v93, 0
    %v122 = vsel %vm99, %v94, 0
    %124 = vmatpush.msra.mxu0 0.0
    %125 = vmatpush.msra.mxu0 0.0
    %126 = vmatpush.msra.mxu0 0.0
    %127 = vmatpush.msra.mxu0 0.0
    %128 = vmatpush.msra.mxu0 0.0
    %129 = vmatpush.msra.mxu0 0.0
    %130 = vmatpush.msra.mxu0 0.0
    %131 = vmatpush.msra.mxu0 0.0
    %132 = vmatpush.msra.mxu0 0.0
    %133 = vmatpush.msra.mxu0 0.0
    %134 = vmatpush.msra.mxu0 0.0
    %135 = vmatpush.msra.mxu0 0.0
    %136 = vmatpush.msra.mxu0 %v98
    %137 = vmatpush.msra.mxu0 %v97
    %138 = vmatpush.msra.mxu0 %v96
    %139 = vmatpush.msra.mxu0 %v95
    %140 = vmatmul.f32.gmra.mxu0 %v101
    %v141 = vpop.f32.mrf.mxu0
    %v142 = vadd.f32 0.0, %v141
    %143 = vmatmul.f32.gmra.mxu0 %v104
    %v144 = vpop.f32.mrf.mxu0
    %v145 = vadd.f32 0.0, %v144
    %146 = vmatmul.f32.gmra.mxu0 %v107
    %v147 = vpop.f32.mrf.mxu0
    %v148 = vadd.f32 0.0, %v147
    %149 = vmatmul.f32.gmra.mxu0 %v110
    %v150 = vpop.f32.mrf.mxu0
    %v151 = vadd.f32 0.0, %v150
    %152 = vmatmul.f32.gmra.mxu0 %v113
    %v153 = vpop.f32.mrf.mxu0
    %v154 = vadd.f32 0.0, %v153
    %155 = vmatmul.f32.gmra.mxu0 %v116
    %v156 = vpop.f32.mrf.mxu0
    %v157 = vadd.f32 0.0, %v156
    %158 = vmatmul.f32.gmra.mxu0 %v119
    %v159 = vpop.f32.mrf.mxu0
    %v160 = vadd.f32 0.0, %v159
    %161 = vmatmul.f32.gmra.mxu0 %v122
    %v162 = vpop.f32.mrf.mxu0
    %v163 = vadd.f32 0.0, %v162
    %164 = vdwg.mxu0
    %165 = vst [vmem:[#allocation2] sm:$0xff] %v142
    %166 = vst [vmem:[#allocation2 + $0x8] sm:$0xff] %v145
    %167 = vst [vmem:[#allocation2 + $0x10] sm:$0xff] %v148
    %168 = vst [vmem:[#allocation2 + $0x18] sm:$0xff] %v151
    %169 = vst [vmem:[#allocation2 + $0x20] sm:$0xff] %v154
    %170 = vst [vmem:[#allocation2 + $0x28] sm:$0xff] %v157
    %171 = vst [vmem:[#allocation2 + $0x30] sm:$0xff] %v160
    %172 = vst [vmem:[#allocation2 + $0x38] sm:$0xff] %v163
    %v173 = vld [vmem:[%s2] sm:$0xff]
    %v174 = vld [vmem:[%s2 + $0x8] sm:$0xff]
    %v175 = vld [vmem:[%s2 + $0x10] sm:$0xff]
    %v176 = vld [vmem:[%s2 + $0x18] sm:$0xff]
    %vm177 = vcmp.ge.s32.totalorder %v46, 64
    %vm178 = vcmp.lt.s32.totalorder %v46, 96
    %vm179 = vmand %vm177, %vm178
    %v180 = vsel %vm179, 2.0, 1.0
    %v181 = vsel %vm179, -1.0, 0.0
    %v182 = vld [vmem:[#allocation2] sm:$0xff]
    %v184 = vsel %vm99, 0.0, 0
    %186 = vmatpush.msra.mxu0 0.0
    %187 = vmatpush.msra.mxu0 0.0
    %188 = vmatpush.msra.mxu0 0.0
    %189 = vmatpush.msra.mxu0 0.0
    %190 = vmatpush.msra.mxu0 0.0
    %191 = vmatpush.msra.mxu0 0.0
    %192 = vmatpush.msra.mxu0 0.0
    %193 = vmatpush.msra.mxu0 0.0
    %194 = vmatpush.msra.mxu0 0.0
    %195 = vmatpush.msra.mxu0 0.0
    %196 = vmatpush.msra.mxu0 0.0
    %197 = vmatpush.msra.mxu0 0.0
    %198 = vmatpush.msra.mxu0 %v176
    %199 = vmatpush.msra.mxu0 %v175
    %200 = vmatpush.msra.mxu0 %v174
    %201 = vmatpush.msra.mxu0 %v173
    %202 = vmatmul.f32.gmra.mxu0 %v184
    %v203 = vpop.f32.mrf.mxu0
    %v204 = vadd.f32 0.0, %v203
    %205 = vdwg.mxu0
    %v206 = vadd.f32 %v182, %v204
    %v207 = vxor.u32 %v206, 2147483648
    %v208 = vmul.f32 %v207, 1.442695
    %v209 = vpow.pop %v208
    %v210 = vadd.f32 %v209, 1.0
    %v211 = vrcp.pop %v210
    %v212 = vmul.f32 %v210, %v211
    %v213 = vsub.f32 1.0, %v212
    %v214 = vmul.f32 %v211, %v213
    %v215 = vadd.f32 %v211, %v214
    %vm216 = vweird.f32 %v210
    %vm217 = vweird.f32 %v211
    %vm218 = vmor %vm216, %vm217
    %v219 = vsel %vm218, %v211, %v215
    %v220 = vand.u32 2147483647, %v210
    %vm221 = vcmp.eq.f32.partialorder %v220, 8.507059e+37
    %v222 = vand.u32 %v210, 2147483648
    %v223 = vor.u32 1.1754944e-38, %v222
    %v224 = vsel %vm221, %v223, %v219
    %v225 = vmul.f32 1.0, %v224
    %v226 = vmul.f32 %v225, %v180
    %v227 = vadd.f32 %v226, %v181
    %v228 = vmul.f32 %v227, 0.0
    %230 = vrot.lane.b32.xlu0 %v227, 64
    %v231 = vpop.permute.xlu0 %230
    %v233 = vmul.f32 %v227, %v231
    %235 = vrot.lane.b32.xlu0 %v233, 32
    %v236 = vpop.permute.xlu0 %235
    %v238 = vadd.f32 %v228, %v236
    %v239 = vtanh.pop %v238
    %241 = vrot.lane.b32.xlu0 %v239, 64
    %v242 = vpop.permute.xlu0 %241
    %v244 = vmul.f32 %v227, %v242
    %s245 = scalar_lea.vmem [#allocation2], 8
    %v246 = vld [vmem:[%s245] sm:$0xff]
    %248 = vrot.lane.b32.xlu0 %v244, 32
    %v249 = vpop.permute.xlu0 %248
    %v250 = vsel %vm99, %v249, 0
    %252 = vmatpush.msra.mxu0 0.0
    %253 = vmatpush.msra.mxu0 0.0
    %254 = vmatpush.msra.mxu0 0.0
    %255 = vmatpush.msra.mxu0 0.0
    %256 = vmatpush.msra.mxu0 0.0
    %257 = vmatpush.msra.mxu0 0.0
    %258 = vmatpush.msra.mxu0 0.0
    %259 = vmatpush.msra.mxu0 0.0
    %260 = vmatpush.msra.mxu0 0.0
    %261 = vmatpush.msra.mxu0 0.0
    %262 = vmatpush.msra.mxu0 0.0
    %263 = vmatpush.msra.mxu0 0.0
    %264 = vmatpush.msra.mxu0 %v176
    %265 = vmatpush.msra.mxu0 %v175
    %266 = vmatpush.msra.mxu0 %v174
    %267 = vmatpush.msra.mxu0 %v173
    %268 = vmatmul.f32.gmra.mxu0 %v250
    %v269 = vpop.f32.mrf.mxu0
    %v270 = vadd.f32 0.0, %v269
    %271 = vdwg.mxu0
    %v272 = vadd.f32 %v246, %v270
    %v273 = vxor.u32 %v272, 2147483648
    %v274 = vmul.f32 %v273, 1.442695
    %v275 = vpow.pop %v274
    %v276 = vadd.f32 %v275, 1.0
    %v277 = vrcp.pop %v276
    %v278 = vmul.f32 %v276, %v277
    %v279 = vsub.f32 1.0, %v278
    %v280 = vmul.f32 %v277, %v279
    %v281 = vadd.f32 %v277, %v280
    %vm282 = vweird.f32 %v276
    %vm283 = vweird.f32 %v277
    %vm284 = vmor %vm282, %vm283
    %v285 = vsel %vm284, %v277, %v281
    %v286 = vand.u32 2147483647, %v276
    %vm287 = vcmp.eq.f32.partialorder %v286, 8.507059e+37
    %v288 = vand.u32 %v276, 2147483648
    %v289 = vor.u32 1.1754944e-38, %v288
    %v290 = vsel %vm287, %v289, %v285
    %v291 = vmul.f32 1.0, %v290
    %v292 = vmul.f32 %v291, %v180
    %v293 = vadd.f32 %v292, %v181
    %v294 = vmul.f32 %v293, %v238
    %296 = vrot.lane.b32.xlu0 %v293, 64
    %v297 = vpop.permute.xlu0 %296
    %v299 = vmul.f32 %v293, %v297
    %301 = vrot.lane.b32.xlu0 %v299, 32
    %v302 = vpop.permute.xlu0 %301
    %v304 = vadd.f32 %v294, %v302
    %v305 = vtanh.pop %v304
    %307 = vrot.lane.b32.xlu0 %v305, 64
    %v308 = vpop.permute.xlu0 %307
    %v310 = vmul.f32 %v293, %v308
    %s311 = scalar_lea.vmem [#allocation2], 16
    %v312 = vld [vmem:[%s311] sm:$0xff]
    %314 = vrot.lane.b32.xlu0 %v310, 32
    %v315 = vpop.permute.xlu0 %314
    %v316 = vsel %vm99, %v315, 0
    %318 = vmatpush.msra.mxu0 0.0
    %319 = vmatpush.msra.mxu0 0.0
    %320 = vmatpush.msra.mxu0 0.0
    %321 = vmatpush.msra.mxu0 0.0
    %322 = vmatpush.msra.mxu0 0.0
    %323 = vmatpush.msra.mxu0 0.0
    %324 = vmatpush.msra.mxu0 0.0
    %325 = vmatpush.msra.mxu0 0.0
    %326 = vmatpush.msra.mxu0 0.0
    %327 = vmatpush.msra.mxu0 0.0
    %328 = vmatpush.msra.mxu0 0.0
    %329 = vmatpush.msra.mxu0 0.0
    %330 = vmatpush.msra.mxu0 %v176
    %331 = vmatpush.msra.mxu0 %v175
    %332 = vmatpush.msra.mxu0 %v174
    %333 = vmatpush.msra.mxu0 %v173
    %334 = vmatmul.f32.gmra.mxu0 %v316
    %v335 = vpop.f32.mrf.mxu0
    %v336 = vadd.f32 0.0, %v335
    %337 = vdwg.mxu0
    %v338 = vadd.f32 %v312, %v336
    %v339 = vxor.u32 %v338, 2147483648
    %v340 = vmul.f32 %v339, 1.442695
    %v341 = vpow.pop %v340
    %v342 = vadd.f32 %v341, 1.0
    %v343 = vrcp.pop %v342
    %v344 = vmul.f32 %v342, %v343
    %v345 = vsub.f32 1.0, %v344
    %v346 = vmul.f32 %v343, %v345
    %v347 = vadd.f32 %v343, %v346
    %vm348 = vweird.f32 %v342
    %vm349 = vweird.f32 %v343
    %vm350 = vmor %vm348, %vm349
    %v351 = vsel %vm350, %v343, %v347
    %v352 = vand.u32 2147483647, %v342
    %vm353 = vcmp.eq.f32.partialorder %v352, 8.507059e+37
    %v354 = vand.u32 %v342, 2147483648
    %v355 = vor.u32 1.1754944e-38, %v354
    %v356 = vsel %vm353, %v355, %v351
    %v357 = vmul.f32 1.0, %v356
    %v358 = vmul.f32 %v357, %v180
    %v359 = vadd.f32 %v358, %v181
    %v360 = vmul.f32 %v359, %v304
    %362 = vrot.lane.b32.xlu0 %v359, 64
    %v363 = vpop.permute.xlu0 %362
    %v365 = vmul.f32 %v359, %v363
    %367 = vrot.lane.b32.xlu0 %v365, 32
    %v368 = vpop.permute.xlu0 %367
    %v370 = vadd.f32 %v360, %v368
    %v371 = vtanh.pop %v370
    %373 = vrot.lane.b32.xlu0 %v371, 64
    %v374 = vpop.permute.xlu0 %373
    %v376 = vmul.f32 %v359, %v374
    %s377 = scalar_lea.vmem [#allocation2], 24
    %v378 = vld [vmem:[%s377] sm:$0xff]
    %380 = vrot.lane.b32.xlu0 %v376, 32
    %v381 = vpop.permute.xlu0 %380
    %v382 = vsel %vm99, %v381, 0
    %384 = vmatpush.msra.mxu0 0.0
    %385 = vmatpush.msra.mxu0 0.0
    %386 = vmatpush.msra.mxu0 0.0
    %387 = vmatpush.msra.mxu0 0.0
    %388 = vmatpush.msra.mxu0 0.0
    %389 = vmatpush.msra.mxu0 0.0
    %390 = vmatpush.msra.mxu0 0.0
    %391 = vmatpush.msra.mxu0 0.0
    %392 = vmatpush.msra.mxu0 0.0
    %393 = vmatpush.msra.mxu0 0.0
    %394 = vmatpush.msra.mxu0 0.0
    %395 = vmatpush.msra.mxu0 0.0
    %396 = vmatpush.msra.mxu0 %v176
    %397 = vmatpush.msra.mxu0 %v175
    %398 = vmatpush.msra.mxu0 %v174
    %399 = vmatpush.msra.mxu0 %v173
    %400 = vmatmul.f32.gmra.mxu0 %v382
    %v401 = vpop.f32.mrf.mxu0
    %v402 = vadd.f32 0.0, %v401
    %403 = vdwg.mxu0
    %v404 = vadd.f32 %v378, %v402
    %v405 = vxor.u32 %v404, 2147483648
    %v406 = vmul.f32 %v405, 1.442695
    %v407 = vpow.pop %v406
    %v408 = vadd.f32 %v407, 1.0
    %v409 = vrcp.pop %v408
    %v410 = vmul.f32 %v408, %v409
    %v411 = vsub.f32 1.0, %v410
    %v412 = vmul.f32 %v409, %v411
    %v413 = vadd.f32 %v409, %v412
    %vm414 = vweird.f32 %v408
    %vm415 = vweird.f32 %v409
    %vm416 = vmor %vm414, %vm415
    %v417 = vsel %vm416, %v409, %v413
    %v418 = vand.u32 2147483647, %v408
    %vm419 = vcmp.eq.f32.partialorder %v418, 8.507059e+37
    %v420 = vand.u32 %v408, 2147483648
    %v421 = vor.u32 1.1754944e-38, %v420
    %v422 = vsel %vm419, %v421, %v417
    %v423 = vmul.f32 1.0, %v422
    %v424 = vmul.f32 %v423, %v180
    %v425 = vadd.f32 %v424, %v181
    %v426 = vmul.f32 %v425, %v370
    %428 = vrot.lane.b32.xlu0 %v425, 64
    %v429 = vpop.permute.xlu0 %428
    %v431 = vmul.f32 %v425, %v429
    %433 = vrot.lane.b32.xlu0 %v431, 32
    %v434 = vpop.permute.xlu0 %433
    %v436 = vadd.f32 %v426, %v434
    %v437 = vtanh.pop %v436
    %439 = vrot.lane.b32.xlu0 %v437, 64
    %v440 = vpop.permute.xlu0 %439
    %v442 = vmul.f32 %v425, %v440
    %s443 = scalar_lea.vmem [#allocation2], 32
    %v444 = vld [vmem:[%s443] sm:$0xff]
    %446 = vrot.lane.b32.xlu0 %v442, 32
    %v447 = vpop.permute.xlu0 %446
    %v448 = vsel %vm99, %v447, 0
    %450 = vmatpush.msra.mxu0 0.0
    %451 = vmatpush.msra.mxu0 0.0
    %452 = vmatpush.msra.mxu0 0.0
    %453 = vmatpush.msra.mxu0 0.0
    %454 = vmatpush.msra.mxu0 0.0
    %455 = vmatpush.msra.mxu0 0.0
    %456 = vmatpush.msra.mxu0 0.0
    %457 = vmatpush.msra.mxu0 0.0
    %458 = vmatpush.msra.mxu0 0.0
    %459 = vmatpush.msra.mxu0 0.0
    %460 = vmatpush.msra.mxu0 0.0
    %461 = vmatpush.msra.mxu0 0.0
    %462 = vmatpush.msra.mxu0 %v176
    %463 = vmatpush.msra.mxu0 %v175
    %464 = vmatpush.msra.mxu0 %v174
    %465 = vmatpush.msra.mxu0 %v173
    %466 = vmatmul.f32.gmra.mxu0 %v448
    %v467 = vpop.f32.mrf.mxu0
    %v468 = vadd.f32 0.0, %v467
    %469 = vdwg.mxu0
    %v470 = vadd.f32 %v444, %v468
    %v471 = vxor.u32 %v470, 2147483648
    %v472 = vmul.f32 %v471, 1.442695
    %v473 = vpow.pop %v472
    %v474 = vadd.f32 %v473, 1.0
    %v475 = vrcp.pop %v474
    %v476 = vmul.f32 %v474, %v475
    %v477 = vsub.f32 1.0, %v476
    %v478 = vmul.f32 %v475, %v477
    %v479 = vadd.f32 %v475, %v478
    %vm480 = vweird.f32 %v474
    %vm481 = vweird.f32 %v475
    %vm482 = vmor %vm480, %vm481
    %v483 = vsel %vm482, %v475, %v479
    %v484 = vand.u32 2147483647, %v474
    %vm485 = vcmp.eq.f32.partialorder %v484, 8.507059e+37
    %v486 = vand.u32 %v474, 2147483648
    %v487 = vor.u32 1.1754944e-38, %v486
    %v488 = vsel %vm485, %v487, %v483
    %v489 = vmul.f32 1.0, %v488
    %v490 = vmul.f32 %v489, %v180
    %v491 = vadd.f32 %v490, %v181
    %v492 = vmul.f32 %v491, %v436
    %494 = vrot.lane.b32.xlu0 %v491, 64
    %v495 = vpop.permute.xlu0 %494
    %v497 = vmul.f32 %v491, %v495
    %499 = vrot.lane.b32.xlu0 %v497, 32
    %v500 = vpop.permute.xlu0 %499
    %v502 = vadd.f32 %v492, %v500
    %v503 = vtanh.pop %v502
    %505 = vrot.lane.b32.xlu0 %v503, 64
    %v506 = vpop.permute.xlu0 %505
    %v508 = vmul.f32 %v491, %v506
    %s509 = scalar_lea.vmem [#allocation2], 40
    %v510 = vld [vmem:[%s509] sm:$0xff]
    %512 = vrot.lane.b32.xlu0 %v508, 32
    %v513 = vpop.permute.xlu0 %512
    %v514 = vsel %vm99, %v513, 0
    %516 = vmatpush.msra.mxu0 0.0
    %517 = vmatpush.msra.mxu0 0.0
    %518 = vmatpush.msra.mxu0 0.0
    %519 = vmatpush.msra.mxu0 0.0
    %520 = vmatpush.msra.mxu0 0.0
    %521 = vmatpush.msra.mxu0 0.0
    %522 = vmatpush.msra.mxu0 0.0
    %523 = vmatpush.msra.mxu0 0.0
    %524 = vmatpush.msra.mxu0 0.0
    %525 = vmatpush.msra.mxu0 0.0
    %526 = vmatpush.msra.mxu0 0.0
    %527 = vmatpush.msra.mxu0 0.0
    %528 = vmatpush.msra.mxu0 %v176
    %529 = vmatpush.msra.mxu0 %v175
    %530 = vmatpush.msra.mxu0 %v174
    %531 = vmatpush.msra.mxu0 %v173
    %532 = vmatmul.f32.gmra.mxu0 %v514
    %v533 = vpop.f32.mrf.mxu0
    %v534 = vadd.f32 0.0, %v533
    %535 = vdwg.mxu0
    %v536 = vadd.f32 %v510, %v534
    %v537 = vxor.u32 %v536, 2147483648
    %v538 = vmul.f32 %v537, 1.442695
    %v539 = vpow.pop %v538
    %v540 = vadd.f32 %v539, 1.0
    %v541 = vrcp.pop %v540
    %v542 = vmul.f32 %v540, %v541
    %v543 = vsub.f32 1.0, %v542
    %v544 = vmul.f32 %v541, %v543
    %v545 = vadd.f32 %v541, %v544
    %vm546 = vweird.f32 %v540
    %vm547 = vweird.f32 %v541
    %vm548 = vmor %vm546, %vm547
    %v549 = vsel %vm548, %v541, %v545
    %v550 = vand.u32 2147483647, %v540
    %vm551 = vcmp.eq.f32.partialorder %v550, 8.507059e+37
    %v552 = vand.u32 %v540, 2147483648
    %v553 = vor.u32 1.1754944e-38, %v552
    %v554 = vsel %vm551, %v553, %v549
    %v555 = vmul.f32 1.0, %v554
    %v556 = vmul.f32 %v555, %v180
    %v557 = vadd.f32 %v556, %v181
    %v558 = vmul.f32 %v557, %v502
    %560 = vrot.lane.b32.xlu0 %v557, 64
    %v561 = vpop.permute.xlu0 %560
    %v563 = vmul.f32 %v557, %v561
    %565 = vrot.lane.b32.xlu0 %v563, 32
    %v566 = vpop.permute.xlu0 %565
    %v568 = vadd.f32 %v558, %v566
    %v569 = vtanh.pop %v568
    %571 = vrot.lane.b32.xlu0 %v569, 64
    %v572 = vpop.permute.xlu0 %571
    %v574 = vmul.f32 %v557, %v572
    %s575 = scalar_lea.vmem [#allocation2], 48
    %v576 = vld [vmem:[%s575] sm:$0xff]
    %578 = vrot.lane.b32.xlu0 %v574, 32
    %v579 = vpop.permute.xlu0 %578
    %v580 = vsel %vm99, %v579, 0
    %582 = vmatpush.msra.mxu0 0.0
    %583 = vmatpush.msra.mxu0 0.0
    %584 = vmatpush.msra.mxu0 0.0
    %585 = vmatpush.msra.mxu0 0.0
    %586 = vmatpush.msra.mxu0 0.0
    %587 = vmatpush.msra.mxu0 0.0
    %588 = vmatpush.msra.mxu0 0.0
    %589 = vmatpush.msra.mxu0 0.0
    %590 = vmatpush.msra.mxu0 0.0
    %591 = vmatpush.msra.mxu0 0.0
    %592 = vmatpush.msra.mxu0 0.0
    %593 = vmatpush.msra.mxu0 0.0
    %594 = vmatpush.msra.mxu0 %v176
    %595 = vmatpush.msra.mxu0 %v175
    %596 = vmatpush.msra.mxu0 %v174
    %597 = vmatpush.msra.mxu0 %v173
    %598 = vmatmul.f32.gmra.mxu0 %v580
    %v599 = vpop.f32.mrf.mxu0
    %v600 = vadd.f32 0.0, %v599
    %601 = vdwg.mxu0
    %v602 = vadd.f32 %v576, %v600
    %v603 = vxor.u32 %v602, 2147483648
    %v604 = vmul.f32 %v603, 1.442695
    %v605 = vpow.pop %v604
    %v606 = vadd.f32 %v605, 1.0
    %v607 = vrcp.pop %v606
    %v608 = vmul.f32 %v606, %v607
    %v609 = vsub.f32 1.0, %v608
    %v610 = vmul.f32 %v607, %v609
    %v611 = vadd.f32 %v607, %v610
    %vm612 = vweird.f32 %v606
    %vm613 = vweird.f32 %v607
    %vm614 = vmor %vm612, %vm613
    %v615 = vsel %vm614, %v607, %v611
    %v616 = vand.u32 2147483647, %v606
    %vm617 = vcmp.eq.f32.partialorder %v616, 8.507059e+37
    %v618 = vand.u32 %v606, 2147483648
    %v619 = vor.u32 1.1754944e-38, %v618
    %v620 = vsel %vm617, %v619, %v615
    %v621 = vmul.f32 1.0, %v620
    %v622 = vmul.f32 %v621, %v180
    %v623 = vadd.f32 %v622, %v181
    %v624 = vmul.f32 %v623, %v568
    %626 = vrot.lane.b32.xlu0 %v623, 64
    %v627 = vpop.permute.xlu0 %626
    %v629 = vmul.f32 %v623, %v627
    %631 = vrot.lane.b32.xlu0 %v629, 32
    %v632 = vpop.permute.xlu0 %631
    %v634 = vadd.f32 %v624, %v632
    %v635 = vtanh.pop %v634
    %637 = vrot.lane.b32.xlu0 %v635, 64
    %v638 = vpop.permute.xlu0 %637
    %v640 = vmul.f32 %v623, %v638
    %s641 = scalar_lea.vmem [#allocation2], 56
    %v642 = vld [vmem:[%s641] sm:$0xff]
    %644 = vrot.lane.b32.xlu0 %v640, 32
    %v645 = vpop.permute.xlu0 %644
    %v646 = vsel %vm99, %v645, 0
    %648 = vmatpush.msra.mxu0 0.0
    %649 = vmatpush.msra.mxu0 0.0
    %650 = vmatpush.msra.mxu0 0.0
    %651 = vmatpush.msra.mxu0 0.0
    %652 = vmatpush.msra.mxu0 0.0
    %653 = vmatpush.msra.mxu0 0.0
    %654 = vmatpush.msra.mxu0 0.0
    %655 = vmatpush.msra.mxu0 0.0
    %656 = vmatpush.msra.mxu0 0.0
    %657 = vmatpush.msra.mxu0 0.0
    %658 = vmatpush.msra.mxu0 0.0
    %659 = vmatpush.msra.mxu0 0.0
    %660 = vmatpush.msra.mxu0 %v176
    %661 = vmatpush.msra.mxu0 %v175
    %662 = vmatpush.msra.mxu0 %v174
    %663 = vmatpush.msra.mxu0 %v173
    %664 = vmatmul.f32.gmra.mxu0 %v646
    %v665 = vpop.f32.mrf.mxu0
    %v666 = vadd.f32 0.0, %v665
    %667 = vdwg.mxu0
    %v668 = vadd.f32 %v642, %v666
    %v669 = vxor.u32 %v668, 2147483648
    %v670 = vmul.f32 %v669, 1.442695
    %v671 = vpow.pop %v670
    %v672 = vadd.f32 %v671, 1.0
    %v673 = vrcp.pop %v672
    %v674 = vmul.f32 %v672, %v673
    %v675 = vsub.f32 1.0, %v674
    %v676 = vmul.f32 %v673, %v675
    %v677 = vadd.f32 %v673, %v676
    %vm678 = vweird.f32 %v672
    %vm679 = vweird.f32 %v673
    %vm680 = vmor %vm678, %vm679
    %v681 = vsel %vm680, %v673, %v677
    %v682 = vand.u32 2147483647, %v672
    %vm683 = vcmp.eq.f32.partialorder %v682, 8.507059e+37
    %v684 = vand.u32 %v672, 2147483648
    %v685 = vor.u32 1.1754944e-38, %v684
    %v686 = vsel %vm683, %v685, %v681
    %v687 = vmul.f32 1.0, %v686
    %v688 = vmul.f32 %v687, %v180
    %v689 = vadd.f32 %v688, %v181
    %v690 = vmul.f32 %v689, %v634
    %692 = vrot.lane.b32.xlu0 %v689, 64
    %v693 = vpop.permute.xlu0 %692
    %v695 = vmul.f32 %v689, %v693
    %697 = vrot.lane.b32.xlu0 %v695, 32
    %v698 = vpop.permute.xlu0 %697
    %v700 = vadd.f32 %v690, %v698
    %v701 = vtanh.pop %v700
    %703 = vrot.lane.b32.xlu0 %v701, 64
    %v704 = vpop.permute.xlu0 %703
    %v706 = vmul.f32 %v689, %v704
    %v707 = vld [vmem:[#allocation3] sm:$0xff]
    %v708 = vld [vmem:[#allocation3 + $0x8] sm:$0xff]
    %v709 = vld [vmem:[#allocation3 + $0x10] sm:$0xff]
    %v710 = vld [vmem:[#allocation3 + $0x18] sm:$0xff]
    %v711 = vld [vmem:[%s4] sm:$0x1]
    %v713 = vperm.slane %v711, 0
    %716 = vrot.lane.b32.xlu0 %v706, 32
    %v717 = vpop.permute.xlu0 %716
    %v718 = vsel %vm99, %v717, 0
    %720 = vmatpush.msra.mxu0 0.0
    %721 = vmatpush.msra.mxu0 0.0
    %722 = vmatpush.msra.mxu0 0.0
    %723 = vmatpush.msra.mxu0 0.0
    %724 = vmatpush.msra.mxu0 0.0
    %725 = vmatpush.msra.mxu0 0.0
    %726 = vmatpush.msra.mxu0 0.0
    %727 = vmatpush.msra.mxu0 0.0
    %728 = vmatpush.msra.mxu0 0.0
    %729 = vmatpush.msra.mxu0 0.0
    %730 = vmatpush.msra.mxu0 0.0
    %731 = vmatpush.msra.mxu0 0.0
    %732 = vmatpush.msra.mxu0 %v710
    %733 = vmatpush.msra.mxu0 %v709
    %734 = vmatpush.msra.mxu0 %v708
    %735 = vmatpush.msra.mxu0 %v707
    %736 = vmatmul.f32.gmra.mxu0 %v718
    %v737 = vpop.f32.mrf.mxu0
    %v738 = vadd.f32 %v713, %v737
    %739 = vdwg.mxu0
    %740 = vst [vmem:[#allocation6] sm:$0xff] %v738
    // Predicated region
    $region26: #{tpu_custom_call.1} parent=1 // pred_check
      _
    $region27: #{tpu_custom_call.1} parent=1 // pred_check_branch
      %742 = sbr.rel (0) target = $region29
    $region28: #{tpu_custom_call.1} parent=1 // pred_region
      %744 = vsyncadd [#allocation5], 0
      %s746 = sshll.u32 [#allocation6], 4
      %s747 = int_to_ptr.vmem [resolvable:$true] %s746
      %s748 = sshll.u32 %s5, 4
      %s749 = int_to_ptr.hbm [resolvable:$true] %s748
      %751 = dma.vmem_to_hbm [thread:$0]  %s747, 128, %s749, [#allocation5]
    $region29: #{tpu_custom_call.1} parent=1 // pred_fallthru
      _
    // Predicated region
    $region30: #{tpu_custom_call.1} parent=1 // pred_check
      _
    $region31: #{tpu_custom_call.1} parent=1 // pred_check_branch
      %753 = sbr.rel (0) target = $region33
    $region32: #{tpu_custom_call.1} parent=1 // pred_region
      %755 = dma.done [#allocation5], 128
    $region33: #{tpu_custom_call.1} parent=1 // pred_fallthru
      _
    %756 = vsyncpa [#allocation4], 1
    %757 = vsyncpa [#allocation5], 1

</llo_original>
